<compile_context>
chip_gen: v6e
topology: v6e:2x2x1
jax: 0.10.0
libtpu: 0.0.40
codegen_flags: <defaults>
</compile_context>

<pallas_src>
import functools

import jax
import jax.numpy as jnp
from jax.experimental import pallas as pl
from jax.experimental.pallas import tpu as pltpu

HIDDEN = 160        # out_features of both Linear layers in mutation_encoder
HIDDEN_PAD = 256    # lane-dense / MXU-N-aligned padded width (zeros beyond 160)


def _molecular_branch_kernel(x_ref, w1_ref, b1_ref, w2_ref, b2_ref, o_ref, *, m):
    """One batch tile.

    x_ref : (tb*m, D)   flattened (batch, mutation) rows, sublane-dense
    w1    : (D, 256)    Linear1 weight, zero-padded cols 160..255
    b1    : (1, 256)    Linear1 bias (f32, zero-padded)
    w2    : (256, 256)  Linear2 weight pre-scaled by 1/m (mean folded in), zero-padded
    b2    : (1, 256)    Linear2 bias (f32, zero-padded)
    o_ref : (tb, 256)   f32 output tile (lane-dense store)
    """
    tb = o_ref.shape[0]

    # Linear(D, 160) + Tanh. Padded columns stay exactly zero: tanh(0 + 0) == 0.
    h = jnp.tanh(
        jnp.dot(x_ref[...], w1_ref[...], preferred_element_type=jnp.float32)
        + b1_ref[...]
    )
    # TODO(synk): Dropout(p=0.1) is identity at inference time; no PRNG mask applied.

    # Sum over the mutation axis; the 1/m mean scale is folded into w2, and mean
    # commutes with the affine map, so summing here is exact.
    h_sum = jnp.sum(h.reshape(tb, m, HIDDEN_PAD), axis=1)  # (tb, 256)

    # Linear(160, 160) on the pooled rows only.
    y = (
        jnp.dot(h_sum.astype(w2_ref.dtype), w2_ref[...],
                preferred_element_type=jnp.float32)
        + b2_ref[...]
    )
    o_ref[...] = y.astype(o_ref.dtype)   # dense (tb, 256) full-tile store


def _pick_batch_tile(batch, m, d, in_itemsize):
    """Batch rows per grid step (multiple of 8), VMEM-budgeted."""
    # Per-batch-row VMEM footprint inside one grid step:
    #   x tile (2-deep pipeline) + f32 hidden intermediate (+ regroup copy)
    #   + pooled/output rows (2-buffered) + slack.
    per_row = (2 * m * d * in_itemsize
               + 2 * m * HIDDEN_PAD * 4
               + 8 * HIDDEN_PAD * 4)
    budget = 20 * 1024 * 1024            # stays under the 32 MiB scoped default
    tb_vmem = max(8, (budget // per_row) // 8 * 8)
    # ~2 MiB of x per grid step amortizes the ~0.35 us fixed per-step cost.
    tb_stream = max(8, ((2 * 1024 * 1024) // max(m * d * in_itemsize, 1)) // 8 * 8)
    tb = min(tb_vmem, tb_stream)

    b8 = ((batch + 7) // 8) * 8
    if b8 <= tb:
        # Whole (padded) batch fits in one step. Split in two only if each half
        # still moves a meaningful amount, so both v7x TensorCores get work.
        half = (b8 // 2) // 8 * 8
        if half >= 8 and half * m * d * in_itemsize >= 512 * 1024:
            return half
        return b8
    return tb


def molecular_branch_forward(x, params, *, tb=None, stream_bf16=False):
    """x: (B, M, D) float32. Returns (B, 160) float32."""
    w1, b1, w2, b2 = params
    B, M, D = x.shape
    if M == 0:
        # PyTorch branch: no mutations -> zeros(batch, out_features)
        return jnp.zeros((B, HIDDEN), dtype=jnp.float32)

    in_dtype = jnp.bfloat16 if stream_bf16 else jnp.float32
    in_itemsize = jnp.dtype(in_dtype).itemsize

    if tb is None:
        tb = _pick_batch_tile(B, M, D, in_itemsize)
    tb = max(8, (int(tb) // 8) * 8)

    n_tiles = pl.cdiv(B, tb)
    Bp = n_tiles * tb
    if Bp != B:
        # Zero-pad batch; padded rows are computed but sliced away below.
        x = jnp.pad(x, ((0, Bp - B), (0, 0), (0, 0)))

    # Flatten (batch, mutations) -> rows: free contiguous reshape in HBM; keeps the
    # VMEM block 2D (sublane-dense) and removes any in-kernel input relayout.
    x2d = x.reshape(Bp * M, D).astype(in_dtype)

    # Pad the hidden/output lane dim 160 -> 256 (lane-dense stores, full MXU-N
    # passes) and fold the 1/M mean into w2 (kernel sums over mutations).
    pad = HIDDEN_PAD - HIDDEN
    w1p = jnp.pad(w1, ((0, 0), (0, pad))).astype(in_dtype)
    b1p = jnp.pad(b1.reshape(1, HIDDEN), ((0, 0), (0, pad))).astype(jnp.float32)
    w2p = jnp.pad(w2 / jnp.float32(M), ((0, pad), (0, pad))).astype(in_dtype)
    b2p = jnp.pad(b2.reshape(1, HIDDEN), ((0, 0), (0, pad))).astype(jnp.float32)

    flops = 2 * Bp * M * D * HIDDEN_PAD + 2 * Bp * HIDDEN_PAD * HIDDEN_PAD
    transcendentals = Bp * M * HIDDEN_PAD
    bytes_accessed = int(
        x2d.size * in_itemsize
        + Bp * HIDDEN_PAD * 4
        + (w1p.size + w2p.size) * in_itemsize
        + (b1p.size + b2p.size) * 4
    )

    kernel = functools.partial(_molecular_branch_kernel, m=M)

    out = pl.pallas_call(
        kernel,
        out_shape=jax.ShapeDtypeStruct((Bp, HIDDEN_PAD), jnp.float32),
        grid_spec=pltpu.PrefetchScalarGridSpec(
            num_scalar_prefetch=0,
            grid=(n_tiles,),
            in_specs=[
                pl.BlockSpec((tb * M, D), lambda b: (b, 0)),               # x tile (2D)
                pl.BlockSpec((D, HIDDEN_PAD), lambda b: (0, 0)),           # w1 (resident)
                pl.BlockSpec((1, HIDDEN_PAD), lambda b: (0, 0)),           # b1 (resident)
                pl.BlockSpec((HIDDEN_PAD, HIDDEN_PAD), lambda b: (0, 0)),  # w2/M (resident)
                pl.BlockSpec((1, HIDDEN_PAD), lambda b: (0, 0)),           # b2 (resident)
            ],
            out_specs=pl.BlockSpec((tb, HIDDEN_PAD), lambda b: (b, 0)),    # lane-dense store
        ),
        compiler_params=pltpu.CompilerParams(
            dimension_semantics=("parallel",),   # batch tiles shard across TCs (v7x)
        ),
        cost_estimate=pl.CostEstimate(
            flops=flops,
            transcendentals=transcendentals,
            bytes_accessed=bytes_accessed,
        ),
    )(x2d, w1p, b1p, w2p, b2p)
    return out[:B, :HIDDEN]


def init_params(key, in_dim):
    k1, k2, k3, k4 = jax.random.split(key, 4)
    # Deterministic synthetic init (shapes follow nn.Linear(in_dim,160), nn.Linear(160,160))
    bound1 = 1.0 / jnp.sqrt(in_dim)
    bound2 = 1.0 / jnp.sqrt(HIDDEN)
    w1 = jax.random.uniform(k1, (in_dim, HIDDEN), jnp.float32, -bound1, bound1)
    b1 = jax.random.uniform(k2, (1, HIDDEN), jnp.float32, -bound1, bound1)
    w2 = jax.random.uniform(k3, (HIDDEN, HIDDEN), jnp.float32, -bound2, bound2)
    b2 = jax.random.uniform(k4, (1, HIDDEN), jnp.float32, -bound2, bound2)
    return (w1, b1, w2, b2)


def _reference(x, params):
    w1, b1, w2, b2 = params
    h = jnp.tanh(x @ w1 + b1[0])
    y = h @ w2 + b2[0]
    return jnp.mean(y, axis=1)


if __name__ == "__main__":
    key = jax.random.PRNGKey(0)
    kx, kp = jax.random.split(key)

    B, M, D = 2, 8, 32  # batch, num_mutations (seq), mutation_input_dim
    x = jax.random.normal(kx, (B, M, D), dtype=jnp.float32)
    params = init_params(kp, D)

    out = jax.block_until_ready(molecular_branch_forward(x, params))
    ref = _reference(x, params)
    assert out.shape == (B, HIDDEN)
    assert jnp.allclose(out, ref, atol=1e-4, rtol=1e-4)

    # "no mutations" branch
    empty = molecular_branch_forward(jnp.zeros((B, 0, D), jnp.float32), params)
    assert empty.shape == (B, HIDDEN) and bool(jnp.all(empty == 0))

    # larger batch: force multiple grid tiles + batch-padding path
    B2 = 70
    x2 = jax.random.normal(kx, (B2, M, D), dtype=jnp.float32)
    out2 = jax.block_until_ready(molecular_branch_forward(x2, params, tb=32))
    ref2 = _reference(x2, params)
    assert out2.shape == (B2, HIDDEN)
    assert jnp.allclose(out2, ref2, atol=1e-4, rtol=1e-4)

    # auto-tiled path (single big tile for this size)
    out3 = jax.block_until_ready(molecular_branch_forward(x2, params))
    assert jnp.allclose(out3, ref2, atol=1e-4, rtol=1e-4)

    # optional bf16 input streaming (looser tolerance: inputs/weights rounded to bf16)
    out4 = jax.block_until_ready(molecular_branch_forward(x2, params, stream_bf16=True))
    assert jnp.allclose(out4, ref2, atol=5e-2, rtol=5e-2)

    print("KERNEL_OK")
</pallas_src>

<mosaic_0001>
module attributes {stable_mosaic.version = 11 : i64} {
  func.func @_molecular_branch_kernel(%arg0: i32, %arg1: memref<64x32xf32, #tpu.memory_space<vmem>>, %arg2: memref<32x256xf32, #tpu.memory_space<vmem>>, %arg3: memref<1x256xf32, #tpu.memory_space<vmem>>, %arg4: memref<256x256xf32, #tpu.memory_space<vmem>>, %arg5: memref<1x256xf32, #tpu.memory_space<vmem>>, %arg6: memref<8x256xf32, #tpu.memory_space<vmem>>) attributes {dimension_semantics = [#tpu.dimension_semantics<parallel>], iteration_bounds = array<i64: 1>, scalar_prefetch = 0 : i64, scratch_operands = 0 : i64, tpu.core_type = #tpu.core_type<tc>, window_params = [{transform_indices = @transform_0, window_bounds = array<i64: 64, 32>}, {pipeline_mode = #tpu.pipeline_mode<synchronous>, transform_indices = @transform_1, window_bounds = array<i64: 32, 256>}, {pipeline_mode = #tpu.pipeline_mode<synchronous>, transform_indices = @transform_2, window_bounds = array<i64: 1, 256>}, {pipeline_mode = #tpu.pipeline_mode<synchronous>, transform_indices = @transform_3, window_bounds = array<i64: 256, 256>}, {pipeline_mode = #tpu.pipeline_mode<synchronous>, transform_indices = @transform_4, window_bounds = array<i64: 1, 256>}, {transform_indices = @transform_5, window_bounds = array<i64: 8, 256>}]} {
    %c0 = arith.constant 0 : index
    %c0_0 = arith.constant 0 : index
    %0 = vector.load %arg1[%c0, %c0_0] : memref<64x32xf32, #tpu.memory_space<vmem>>, vector<64x32xf32>
    %c0_1 = arith.constant 0 : index
    %c0_2 = arith.constant 0 : index
    %1 = vector.load %arg2[%c0_1, %c0_2] : memref<32x256xf32, #tpu.memory_space<vmem>>, vector<32x256xf32>
    %cst = arith.constant dense<0.000000e+00> : vector<64x256xf32>
    %2 = tpu.matmul %0, %1, %cst {dimension_numbers = #tpu.dot_dimension_numbers<[1], [0], [0], [1], [0, 0, 1, 1], [], []>} : vector<64x32xf32>, vector<32x256xf32>, vector<64x256xf32> -> vector<64x256xf32>
    %c0_3 = arith.constant 0 : index
    %c0_4 = arith.constant 0 : index
    %3 = vector.load %arg3[%c0_3, %c0_4] : memref<1x256xf32, #tpu.memory_space<vmem>>, vector<1x256xf32>
    %4 = vector.broadcast %3 : vector<1x256xf32> to vector<64x256xf32>
    %5 = arith.addf %2, %4 : vector<64x256xf32>
    %6 = math.tanh %5 : vector<64x256xf32>
    %7 = vector.shape_cast %6 : vector<64x256xf32> to vector<8x8x256xf32>
    %cst_5 = arith.constant dense<0.000000e+00> : vector<8x256xf32>
    %8 = vector.multi_reduction <add>, %7, %cst_5 [1] : vector<8x8x256xf32> to vector<8x256xf32>
    %c0_6 = arith.constant 0 : index
    %c0_7 = arith.constant 0 : index
    %9 = vector.load %arg4[%c0_6, %c0_7] : memref<256x256xf32, #tpu.memory_space<vmem>>, vector<256x256xf32>
    %cst_8 = arith.constant dense<0.000000e+00> : vector<8x256xf32>
    %10 = tpu.matmul %8, %9, %cst_8 {dimension_numbers = #tpu.dot_dimension_numbers<[1], [0], [0], [1], [0, 0, 1, 1], [], []>} : vector<8x256xf32>, vector<256x256xf32>, vector<8x256xf32> -> vector<8x256xf32>
    %c0_9 = arith.constant 0 : index
    %c0_10 = arith.constant 0 : index
    %11 = vector.load %arg5[%c0_9, %c0_10] : memref<1x256xf32, #tpu.memory_space<vmem>>, vector<1x256xf32>
    %12 = vector.broadcast %11 : vector<1x256xf32> to vector<8x256xf32>
    %13 = arith.addf %10, %12 : vector<8x256xf32>
    %c0_11 = arith.constant 0 : index
    %c0_12 = arith.constant 0 : index
    %14 = vector.load %arg6[%c0_11, %c0_12] : memref<8x256xf32, #tpu.memory_space<vmem>>, vector<8x256xf32>
    tpu.vector_store %arg6[%c0_11, %c0_12], %13 {strides = array<i32>} : memref<8x256xf32, #tpu.memory_space<vmem>>, vector<8x256xf32>,
    return
  }
  func.func @transform_0(%arg0: i32) -> (i32, i32) {
    %c0_i32 = arith.constant 0 : i32
    %c0_i32_0 = arith.constant 0 : i32
    return %arg0, %c0_i32 : i32, i32
  }
  func.func @transform_1(%arg0: i32) -> (i32, i32) {
    %c0_i32 = arith.constant 0 : i32
    %c0_i32_0 = arith.constant 0 : i32
    %c0_i32_1 = arith.constant 0 : i32
    return %c0_i32, %c0_i32_0 : i32, i32
  }
  func.func @transform_2(%arg0: i32) -> (i32, i32) {
    %c0_i32 = arith.constant 0 : i32
    %c0_i32_0 = arith.constant 0 : i32
    %c0_i32_1 = arith.constant 0 : i32
    return %c0_i32, %c0_i32_0 : i32, i32
  }
  func.func @transform_3(%arg0: i32) -> (i32, i32) {
    %c0_i32 = arith.constant 0 : i32
    %c0_i32_0 = arith.constant 0 : i32
    %c0_i32_1 = arith.constant 0 : i32
    return %c0_i32, %c0_i32_0 : i32, i32
  }
  func.func @transform_4(%arg0: i32) -> (i32, i32) {
    %c0_i32 = arith.constant 0 : i32
    %c0_i32_0 = arith.constant 0 : i32
    %c0_i32_1 = arith.constant 0 : i32
    return %c0_i32, %c0_i32_0 : i32, i32
  }
  func.func @transform_5(%arg0: i32) -> (i32, i32) {
    %c0_i32 = arith.constant 0 : i32
    %c0_i32_0 = arith.constant 0 : i32
    return %arg0, %c0_i32 : i32, i32
  }
}

</mosaic_0001>

<llo_original>
// kernel: tpu_custom_call.1
$region0: #{tpu_custom_call.1}
  #allocation0 [shape = 'u32[]', space=smem, size = 0x4, offset = 0x4, fixed_abs, tag = 'smem constant byte address 0x4 - core index']
  #allocation1 [shape = 'u32[144,128]{1,0:T(1,128)}', space=vmem, size = 0x12000, scoped, tag = 'internal scratch']
  %s0 = inlined_call_operand.vmem [shape: f32[64,32], index: 0, kind: input, shape index: {}]
  %s1 = inlined_call_operand.vmem [shape: f32[32,256], index: 1, kind: input, shape index: {}]
  %s2 = inlined_call_operand.vmem [shape: f32[1,256], index: 2, kind: input, shape index: {}]
  %s3 = inlined_call_operand.hbm [shape: f32[256,256], index: 3, kind: input, shape index: {}]
  %s4 = inlined_call_operand.vmem [shape: f32[1,256], index: 4, kind: input, shape index: {}]
  %s5 = inlined_call_operand.hbm [shape: f32[8,256], index: 5, kind: output, shape index: {}]
  %s6 = sld [smem:[#allocation0]]
  $region34: #{tpu_custom_call.1} parent=0
    _
  %s8 = ssub.s32 1, %s6
  %s9 = scalar_select 0, %s8, %s6
  $region1: #{tpu_custom_call.1} parent=0
    #allocation2 [shape = 'u8[262144]{0}', space=vmem, size = 0x40000, scoped, tag = 'input window, operand 3, single buffered']
    #allocation3 [shape = 's32[1]{0}', space=sflag, size = 0x4, scoped, tag = 'scoped memory for tpu_custom_call.1']
    #allocation4 [shape = 's32[1]{0}', space=sflag, size = 0x4, scoped, tag = 'scoped memory for tpu_custom_call.1']
    #allocation5 [shape = 'u8[8192]{0}', space=vmem, size = 0x2000, scoped, tag = 'output window, operand 0, single buffered']
    %10 = vsyncpa [#allocation3], 0
    %11 = vsyncpa [#allocation4], 0
    // Predicated region
    $region2: #{tpu_custom_call.1} parent=1 // pred_check
      _
    $region3: #{tpu_custom_call.1} parent=1 // pred_check_branch
      %13 = sbr.rel (0) target = $region5
    $region4: #{tpu_custom_call.1} parent=1 // pred_region
      _
    $region5: #{tpu_custom_call.1} parent=1 // pred_fallthru
      _
    // Predicated region
    $region6: #{tpu_custom_call.1} parent=1 // pred_check
      _
    $region7: #{tpu_custom_call.1} parent=1 // pred_check_branch
      %15 = sbr.rel (0) target = $region9
    $region8: #{tpu_custom_call.1} parent=1 // pred_region
      _
    $region9: #{tpu_custom_call.1} parent=1 // pred_fallthru
      _
    // Predicated region
    $region10: #{tpu_custom_call.1} parent=1 // pred_check
      _
    $region11: #{tpu_custom_call.1} parent=1 // pred_check_branch
      %17 = sbr.rel (0) target = $region13
    $region12: #{tpu_custom_call.1} parent=1 // pred_region
      _
    $region13: #{tpu_custom_call.1} parent=1 // pred_fallthru
      _
    // Predicated region
    $region14: #{tpu_custom_call.1} parent=1 // pred_check
      _
    $region15: #{tpu_custom_call.1} parent=1 // pred_check_branch
      %19 = sbr.rel (0) target = $region17
    $region16: #{tpu_custom_call.1} parent=1 // pred_region
      %s21 = ssub.s32 8192, 8192
      %22 = vsyncadd [#allocation3], %s21
      %s23 = sshll.u32 [#allocation2], 4
      %s24 = int_to_ptr.vmem [resolvable:$true] %s23
      %29 = dma.hbm_to_vmem [thread:$0]  %s3, 8192, %s24, [#allocation3], 256, 256, 16
    $region17: #{tpu_custom_call.1} parent=1 // pred_fallthru
      _
    // Predicated region
    $region18: #{tpu_custom_call.1} parent=1 // pred_check
      _
    $region19: #{tpu_custom_call.1} parent=1 // pred_check_branch
      %31 = sbr.rel (0) target = $region21
    $region20: #{tpu_custom_call.1} parent=1 // pred_region
      _
    $region21: #{tpu_custom_call.1} parent=1 // pred_fallthru
      _
    // Predicated region
    $region22: #{tpu_custom_call.1} parent=1 // pred_check
      _
    $region23: #{tpu_custom_call.1} parent=1 // pred_check_branch
      %33 = sbr.rel (0) target = $region25
    $region24: #{tpu_custom_call.1} parent=1 // pred_region
      %34 = dma.done [#allocation3], 8192
    $region25: #{tpu_custom_call.1} parent=1 // pred_fallthru
      _
    %v35 = vld [vmem:[%s0] sm:$0xff]
    %v36 = vld [vmem:[%s0 + $0x8] sm:$0xff]
    %v37 = vld [vmem:[%s0 + $0x10] sm:$0xff]
    %v38 = vld [vmem:[%s0 + $0x18] sm:$0xff]
    %v39 = vld [vmem:[%s0 + $0x20] sm:$0xff]
    %v40 = vld [vmem:[%s0 + $0x28] sm:$0xff]
    %v41 = vld [vmem:[%s0 + $0x30] sm:$0xff]
    %v42 = vld [vmem:[%s0 + $0x38] sm:$0xff]
    %v43 = vld [vmem:[%s1] sm:$0xff]
    %v44 = vld [vmem:[%s1 + $0x8] sm:$0xff]
    %v45 = vld [vmem:[%s1 + $0x10] sm:$0xff]
    %v46 = vld [vmem:[%s1 + $0x18] sm:$0xff]
    %v47 = vld [vmem:[%s1 + $0x20] sm:$0xff]
    %v48 = vld [vmem:[%s1 + $0x28] sm:$0xff]
    %v49 = vld [vmem:[%s1 + $0x30] sm:$0xff]
    %v50 = vld [vmem:[%s1 + $0x38] sm:$0xff]
    %v51 = vld [vmem:[%s2] sm:$0x3]
    %v53 = vlaneseq
    %v54 = vshrl.u32 %v53, 7
    %v55 = vsub.s32 0, %v54
    %v56 = vrot.slane %v51, %v55
    %v57 = vlaneseq
    %v58 = vshrl.u32 %v57, 7
    %v59 = vsub.s32 1, %v58
    %v60 = vrot.slane %v51, %v59
    %vm63 = vcmask 261120
    %v65 = vsel %vm63, %v35, 0
    %v68 = vsel %vm63, %v36, 0
    %v71 = vsel %vm63, %v37, 0
    %v74 = vsel %vm63, %v38, 0
    %v77 = vsel %vm63, %v39, 0
    %v80 = vsel %vm63, %v40, 0
    %v83 = vsel %vm63, %v41, 0
    %v86 = vsel %vm63, %v42, 0
    %88 = vmatprep.subr.mxu0 0.0
    %89 = vmatpush1.msra.mxu0 0.0
    %90 = vmatprep.subr.mxu0 0.0
    %91 = vmatpush1.msra.mxu0 0.0
    %92 = vmatprep.subr.mxu0 0.0
    %93 = vmatpush1.msra.mxu0 0.0
    %94 = vmatprep.subr.mxu0 0.0
    %95 = vmatpush1.msra.mxu0 0.0
    %96 = vmatprep.subr.mxu0 0.0
    %97 = vmatpush1.msra.mxu0 0.0
    %98 = vmatprep.subr.mxu0 0.0
    %99 = vmatpush1.msra.mxu0 0.0
    %100 = vmatprep.subr.mxu0 0.0
    %101 = vmatpush1.msra.mxu0 0.0
    %102 = vmatprep.subr.mxu0 0.0
    %103 = vmatpush1.msra.mxu0 0.0
    %104 = vmatprep.subr.mxu0 0.0
    %105 = vmatpush1.msra.mxu0 0.0
    %106 = vmatprep.subr.mxu0 0.0
    %107 = vmatpush1.msra.mxu0 0.0
    %108 = vmatprep.subr.mxu0 0.0
    %109 = vmatpush1.msra.mxu0 0.0
    %110 = vmatprep.subr.mxu0 0.0
    %111 = vmatpush1.msra.mxu0 0.0
    %112 = vmatprep.subr.mxu0 %v50
    %113 = vmatpush1.msra.mxu0 %v49
    %114 = vmatprep.subr.mxu0 %v48
    %115 = vmatpush1.msra.mxu0 %v47
    %116 = vmatprep.subr.mxu0 %v46
    %117 = vmatpush1.msra.mxu0 %v45
    %118 = vmatprep.subr.mxu0 %v44
    %119 = vmatpush1.msra.mxu0 %v43
    %120 = vmatprep.subr.mxu0 0.0
    %121 = vmatpush2.msra.mxu0 0.0
    %122 = vmatprep.subr.mxu0 0.0
    %123 = vmatpush2.msra.mxu0 0.0
    %124 = vmatprep.subr.mxu0 0.0
    %125 = vmatpush2.msra.mxu0 0.0
    %126 = vmatprep.subr.mxu0 0.0
    %127 = vmatpush2.msra.mxu0 0.0
    %128 = vmatprep.subr.mxu0 0.0
    %129 = vmatpush2.msra.mxu0 0.0
    %130 = vmatprep.subr.mxu0 0.0
    %131 = vmatpush2.msra.mxu0 0.0
    %132 = vmatprep.subr.mxu0 0.0
    %133 = vmatpush2.msra.mxu0 0.0
    %134 = vmatprep.subr.mxu0 0.0
    %135 = vmatpush2.msra.mxu0 0.0
    %136 = vmatprep.subr.mxu0 0.0
    %137 = vmatpush2.msra.mxu0 0.0
    %138 = vmatprep.subr.mxu0 0.0
    %139 = vmatpush2.msra.mxu0 0.0
    %140 = vmatprep.subr.mxu0 0.0
    %141 = vmatpush2.msra.mxu0 0.0
    %142 = vmatprep.subr.mxu0 0.0
    %143 = vmatpush2.msra.mxu0 0.0
    %144 = vmatprep.subr.mxu0 0.0
    %145 = vmatpush2.msra.mxu0 0.0
    %146 = vmatprep.subr.mxu0 0.0
    %147 = vmatpush2.msra.mxu0 0.0
    %148 = vmatprep.subr.mxu0 0.0
    %149 = vmatpush2.msra.mxu0 0.0
    %150 = vmatprep.subr.mxu0 0.0
    %151 = vmatpush2.msra.mxu0 0.0
    %152 = vmatprep.mubr.f32.mxu0 0.0
    %153 = vmatmul.mubr.f32.gmra.mxu0 %v65
    %v154 = vpop.f32.mrf.mxu0
    %v155 = vadd.f32 %v56, %v154
    %v156 = vpop.f32.mrf.mxu0
    %v157 = vadd.f32 %v60, %v156
    %158 = vmatprep.mubr.f32.mxu0 0.0
    %159 = vmatmul.mubr.f32.gmra.mxu0 %v68
    %v160 = vpop.f32.mrf.mxu0
    %v161 = vadd.f32 %v56, %v160
    %v162 = vpop.f32.mrf.mxu0
    %v163 = vadd.f32 %v60, %v162
    %164 = vmatprep.mubr.f32.mxu0 0.0
    %165 = vmatmul.mubr.f32.gmra.mxu0 %v71
    %v166 = vpop.f32.mrf.mxu0
    %v167 = vadd.f32 %v56, %v166
    %v168 = vpop.f32.mrf.mxu0
    %v169 = vadd.f32 %v60, %v168
    %170 = vmatprep.mubr.f32.mxu0 0.0
    %171 = vmatmul.mubr.f32.gmra.mxu0 %v74
    %v172 = vpop.f32.mrf.mxu0
    %v173 = vadd.f32 %v56, %v172
    %v174 = vpop.f32.mrf.mxu0
    %v175 = vadd.f32 %v60, %v174
    %176 = vmatprep.mubr.f32.mxu0 0.0
    %177 = vmatmul.mubr.f32.gmra.mxu0 %v77
    %v178 = vpop.f32.mrf.mxu0
    %v179 = vadd.f32 %v56, %v178
    %v180 = vpop.f32.mrf.mxu0
    %v181 = vadd.f32 %v60, %v180
    %182 = vmatprep.mubr.f32.mxu0 0.0
    %183 = vmatmul.mubr.f32.gmra.mxu0 %v80
    %v184 = vpop.f32.mrf.mxu0
    %v185 = vadd.f32 %v56, %v184
    %v186 = vpop.f32.mrf.mxu0
    %v187 = vadd.f32 %v60, %v186
    %188 = vmatprep.mubr.f32.mxu0 0.0
    %189 = vmatmul.mubr.f32.gmra.mxu0 %v83
    %v190 = vpop.f32.mrf.mxu0
    %v191 = vadd.f32 %v56, %v190
    %v192 = vpop.f32.mrf.mxu0
    %v193 = vadd.f32 %v60, %v192
    %194 = vmatprep.mubr.f32.mxu0 0.0
    %195 = vmatmul.mubr.f32.gmra.mxu0 %v86
    %v196 = vpop.f32.mrf.mxu0
    %v197 = vadd.f32 %v56, %v196
    %v198 = vpop.f32.mrf.mxu0
    %v199 = vadd.f32 %v60, %v198
    %200 = vdwg.mxu0
    %v201 = vtanh.pop %v155
    %v202 = vtanh.pop %v157
    %v203 = vtanh.pop %v161
    %v204 = vtanh.pop %v163
    %v205 = vtanh.pop %v167
    %v206 = vtanh.pop %v169
    %v207 = vtanh.pop %v173
    %v208 = vtanh.pop %v175
    %v209 = vtanh.pop %v179
    %v210 = vtanh.pop %v181
    %v211 = vtanh.pop %v185
    %v212 = vtanh.pop %v187
    %v213 = vtanh.pop %v191
    %v214 = vtanh.pop %v193
    %v215 = vtanh.pop %v197
    %v216 = vtanh.pop %v199
    %v217 = vrot.slane %v201, 4
    %v218 = vadd.f32 %v201, %v217
    %v219 = vrot.slane %v218, 2
    %v220 = vadd.f32 %v218, %v219
    %v221 = vrot.slane %v220, 1
    %v222 = vadd.f32 %v220, %v221
    %v223 = vrot.slane %v202, 4
    %v224 = vadd.f32 %v202, %v223
    %v225 = vrot.slane %v224, 2
    %v226 = vadd.f32 %v224, %v225
    %v227 = vrot.slane %v226, 1
    %v228 = vadd.f32 %v226, %v227
    %v229 = vrot.slane %v203, 4
    %v230 = vadd.f32 %v203, %v229
    %v231 = vrot.slane %v230, 2
    %v232 = vadd.f32 %v230, %v231
    %v233 = vrot.slane %v232, 1
    %v234 = vadd.f32 %v232, %v233
    %v235 = vrot.slane %v204, 4
    %v236 = vadd.f32 %v204, %v235
    %v237 = vrot.slane %v236, 2
    %v238 = vadd.f32 %v236, %v237
    %v239 = vrot.slane %v238, 1
    %v240 = vadd.f32 %v238, %v239
    %v241 = vrot.slane %v205, 4
    %v242 = vadd.f32 %v205, %v241
    %v243 = vrot.slane %v242, 2
    %v244 = vadd.f32 %v242, %v243
    %v245 = vrot.slane %v244, 1
    %v246 = vadd.f32 %v244, %v245
    %v247 = vrot.slane %v206, 4
    %v248 = vadd.f32 %v206, %v247
    %v249 = vrot.slane %v248, 2
    %v250 = vadd.f32 %v248, %v249
    %v251 = vrot.slane %v250, 1
    %v252 = vadd.f32 %v250, %v251
    %v253 = vrot.slane %v207, 4
    %v254 = vadd.f32 %v207, %v253
    %v255 = vrot.slane %v254, 2
    %v256 = vadd.f32 %v254, %v255
    %v257 = vrot.slane %v256, 1
    %v258 = vadd.f32 %v256, %v257
    %v259 = vrot.slane %v208, 4
    %v260 = vadd.f32 %v208, %v259
    %v261 = vrot.slane %v260, 2
    %v262 = vadd.f32 %v260, %v261
    %v263 = vrot.slane %v262, 1
    %v264 = vadd.f32 %v262, %v263
    %v265 = vrot.slane %v209, 4
    %v266 = vadd.f32 %v209, %v265
    %v267 = vrot.slane %v266, 2
    %v268 = vadd.f32 %v266, %v267
    %v269 = vrot.slane %v268, 1
    %v270 = vadd.f32 %v268, %v269
    %v271 = vrot.slane %v210, 4
    %v272 = vadd.f32 %v210, %v271
    %v273 = vrot.slane %v272, 2
    %v274 = vadd.f32 %v272, %v273
    %v275 = vrot.slane %v274, 1
    %v276 = vadd.f32 %v274, %v275
    %v277 = vrot.slane %v211, 4
    %v278 = vadd.f32 %v211, %v277
    %v279 = vrot.slane %v278, 2
    %v280 = vadd.f32 %v278, %v279
    %v281 = vrot.slane %v280, 1
    %v282 = vadd.f32 %v280, %v281
    %v283 = vrot.slane %v212, 4
    %v284 = vadd.f32 %v212, %v283
    %v285 = vrot.slane %v284, 2
    %v286 = vadd.f32 %v284, %v285
    %v287 = vrot.slane %v286, 1
    %v288 = vadd.f32 %v286, %v287
    %v289 = vrot.slane %v213, 4
    %v290 = vadd.f32 %v213, %v289
    %v291 = vrot.slane %v290, 2
    %v292 = vadd.f32 %v290, %v291
    %v293 = vrot.slane %v292, 1
    %v294 = vadd.f32 %v292, %v293
    %v295 = vrot.slane %v214, 4
    %v296 = vadd.f32 %v214, %v295
    %v297 = vrot.slane %v296, 2
    %v298 = vadd.f32 %v296, %v297
    %v299 = vrot.slane %v298, 1
    %v300 = vadd.f32 %v298, %v299
    %v301 = vrot.slane %v215, 4
    %v302 = vadd.f32 %v215, %v301
    %v303 = vrot.slane %v302, 2
    %v304 = vadd.f32 %v302, %v303
    %v305 = vrot.slane %v304, 1
    %v306 = vadd.f32 %v304, %v305
    %v307 = vrot.slane %v216, 4
    %v308 = vadd.f32 %v216, %v307
    %v309 = vrot.slane %v308, 2
    %v310 = vadd.f32 %v308, %v309
    %v311 = vrot.slane %v310, 1
    %v312 = vadd.f32 %v310, %v311
    %v313 = vld [vmem:[#allocation2] sm:$0xff]
    %v314 = vld [vmem:[#allocation2 + $0x8] sm:$0xff]
    %v315 = vld [vmem:[#allocation2 + $0x10] sm:$0xff]
    %v316 = vld [vmem:[#allocation2 + $0x18] sm:$0xff]
    %v317 = vld [vmem:[#allocation2 + $0x20] sm:$0xff]
    %v318 = vld [vmem:[#allocation2 + $0x28] sm:$0xff]
    %v319 = vld [vmem:[#allocation2 + $0x30] sm:$0xff]
    %v320 = vld [vmem:[#allocation2 + $0x38] sm:$0xff]
    %v321 = vld [vmem:[#allocation2 + $0x40] sm:$0xff]
    %v322 = vld [vmem:[#allocation2 + $0x48] sm:$0xff]
    %v323 = vld [vmem:[#allocation2 + $0x50] sm:$0xff]
    %v324 = vld [vmem:[#allocation2 + $0x58] sm:$0xff]
    %v325 = vld [vmem:[#allocation2 + $0x60] sm:$0xff]
    %v326 = vld [vmem:[#allocation2 + $0x68] sm:$0xff]
    %v327 = vld [vmem:[#allocation2 + $0x70] sm:$0xff]
    %v328 = vld [vmem:[#allocation2 + $0x78] sm:$0xff]
    %v329 = vld [vmem:[#allocation2 + $0x80] sm:$0xff]
    %v330 = vld [vmem:[#allocation2 + $0x88] sm:$0xff]
    %v331 = vld [vmem:[#allocation2 + $0x90] sm:$0xff]
    %v332 = vld [vmem:[#allocation2 + $0x98] sm:$0xff]
    %v333 = vld [vmem:[#allocation2 + $0xa0] sm:$0xff]
    %v334 = vld [vmem:[#allocation2 + $0xa8] sm:$0xff]
    %v335 = vld [vmem:[#allocation2 + $0xb0] sm:$0xff]
    %v336 = vld [vmem:[#allocation2 + $0xb8] sm:$0xff]
    %v337 = vld [vmem:[#allocation2 + $0xc0] sm:$0xff]
    %v338 = vld [vmem:[#allocation2 + $0xc8] sm:$0xff]
    %v339 = vld [vmem:[#allocation2 + $0xd0] sm:$0xff]
    %v340 = vld [vmem:[#allocation2 + $0xd8] sm:$0xff]
    %v341 = vld [vmem:[#allocation2 + $0xe0] sm:$0xff]
    %v342 = vld [vmem:[#allocation2 + $0xe8] sm:$0xff]
    %v343 = vld [vmem:[#allocation2 + $0xf0] sm:$0xff]
    %v344 = vld [vmem:[#allocation2 + $0xf8] sm:$0xff]
    %v345 = vld [vmem:[#allocation2 + $0x100] sm:$0xff]
    %v346 = vld [vmem:[#allocation2 + $0x108] sm:$0xff]
    %v347 = vld [vmem:[#allocation2 + $0x110] sm:$0xff]
    %v348 = vld [vmem:[#allocation2 + $0x118] sm:$0xff]
    %v349 = vld [vmem:[#allocation2 + $0x120] sm:$0xff]
    %v350 = vld [vmem:[#allocation2 + $0x128] sm:$0xff]
    %v351 = vld [vmem:[#allocation2 + $0x130] sm:$0xff]
    %v352 = vld [vmem:[#allocation2 + $0x138] sm:$0xff]
    %v353 = vld [vmem:[#allocation2 + $0x140] sm:$0xff]
    %v354 = vld [vmem:[#allocation2 + $0x148] sm:$0xff]
    %v355 = vld [vmem:[#allocation2 + $0x150] sm:$0xff]
    %v356 = vld [vmem:[#allocation2 + $0x158] sm:$0xff]
    %v357 = vld [vmem:[#allocation2 + $0x160] sm:$0xff]
    %v358 = vld [vmem:[#allocation2 + $0x168] sm:$0xff]
    %v359 = vld [vmem:[#allocation2 + $0x170] sm:$0xff]
    %v360 = vld [vmem:[#allocation2 + $0x178] sm:$0xff]
    %v361 = vld [vmem:[#allocation2 + $0x180] sm:$0xff]
    %v362 = vld [vmem:[#allocation2 + $0x188] sm:$0xff]
    %v363 = vld [vmem:[#allocation2 + $0x190] sm:$0xff]
    %v364 = vld [vmem:[#allocation2 + $0x198] sm:$0xff]
    %v365 = vld [vmem:[#allocation2 + $0x1a0] sm:$0xff]
    %v366 = vld [vmem:[#allocation2 + $0x1a8] sm:$0xff]
    %v367 = vld [vmem:[#allocation2 + $0x1b0] sm:$0xff]
    %v368 = vld [vmem:[#allocation2 + $0x1b8] sm:$0xff]
    %v369 = vld [vmem:[#allocation2 + $0x1c0] sm:$0xff]
    %v370 = vld [vmem:[#allocation2 + $0x1c8] sm:$0xff]
    %v371 = vld [vmem:[#allocation2 + $0x1d0] sm:$0xff]
    %v372 = vld [vmem:[#allocation2 + $0x1d8] sm:$0xff]
    %v373 = vld [vmem:[#allocation2 + $0x1e0] sm:$0xff]
    %v374 = vld [vmem:[#allocation2 + $0x1e8] sm:$0xff]
    %v375 = vld [vmem:[#allocation2 + $0x1f0] sm:$0xff]
    %v376 = vld [vmem:[#allocation2 + $0x1f8] sm:$0xff]
    %v377 = vld [vmem:[%s4] sm:$0x3]
    %v379 = vlaneseq
    %v380 = vshrl.u32 %v379, 7
    %v381 = vsub.s32 0, %v380
    %v382 = vrot.slane %v377, %v381
    %v383 = vlaneseq
    %v384 = vshrl.u32 %v383, 7
    %v385 = vsub.s32 1, %v384
    %v386 = vrot.slane %v377, %v385
    %vm405 = vcmask 1041409
    %v406 = vsel %vm405, %v234, %v222
    %vm407 = vcmask 1042434
    %v408 = vsel %vm407, %v246, %v406
    %vm409 = vcmask 1043459
    %v410 = vsel %vm409, %v258, %v408
    %vm411 = vcmask 1044484
    %v412 = vsel %vm411, %v270, %v410
    %vm413 = vcmask 1045509
    %v414 = vsel %vm413, %v282, %v412
    %vm415 = vcmask 1046534
    %v416 = vsel %vm415, %v294, %v414
    %vm417 = vcmask 1047559
    %v418 = vsel %vm417, %v306, %v416
    %v419 = vsel %vm405, %v240, %v228
    %v420 = vsel %vm407, %v252, %v419
    %v421 = vsel %vm409, %v264, %v420
    %v422 = vsel %vm411, %v276, %v421
    %v423 = vsel %vm413, %v288, %v422
    %v424 = vsel %vm415, %v300, %v423
    %v425 = vsel %vm417, %v312, %v424
    %428 = vmatprep.subr.mxu0 %v344
    %429 = vmatpush1.msra.mxu0 %v343
    %430 = vmatprep.subr.mxu0 %v342
    %431 = vmatpush1.msra.mxu0 %v341
    %432 = vmatprep.subr.mxu0 %v340
    %433 = vmatpush1.msra.mxu0 %v339
    %434 = vmatprep.subr.mxu0 %v338
    %435 = vmatpush1.msra.mxu0 %v337
    %436 = vmatprep.subr.mxu0 %v336
    %437 = vmatpush1.msra.mxu0 %v335
    %438 = vmatprep.subr.mxu0 %v334
    %439 = vmatpush1.msra.mxu0 %v333
    %440 = vmatprep.subr.mxu0 %v332
    %441 = vmatpush1.msra.mxu0 %v331
    %442 = vmatprep.subr.mxu0 %v330
    %443 = vmatpush1.msra.mxu0 %v329
    %444 = vmatprep.subr.mxu0 %v328
    %445 = vmatpush1.msra.mxu0 %v327
    %446 = vmatprep.subr.mxu0 %v326
    %447 = vmatpush1.msra.mxu0 %v325
    %448 = vmatprep.subr.mxu0 %v324
    %449 = vmatpush1.msra.mxu0 %v323
    %450 = vmatprep.subr.mxu0 %v322
    %451 = vmatpush1.msra.mxu0 %v321
    %452 = vmatprep.subr.mxu0 %v320
    %453 = vmatpush1.msra.mxu0 %v319
    %454 = vmatprep.subr.mxu0 %v318
    %455 = vmatpush1.msra.mxu0 %v317
    %456 = vmatprep.subr.mxu0 %v316
    %457 = vmatpush1.msra.mxu0 %v315
    %458 = vmatprep.subr.mxu0 %v314
    %459 = vmatpush1.msra.mxu0 %v313
    %460 = vmatprep.subr.mxu0 %v376
    %461 = vmatpush2.msra.mxu0 %v375
    %462 = vmatprep.subr.mxu0 %v374
    %463 = vmatpush2.msra.mxu0 %v373
    %464 = vmatprep.subr.mxu0 %v372
    %465 = vmatpush2.msra.mxu0 %v371
    %466 = vmatprep.subr.mxu0 %v370
    %467 = vmatpush2.msra.mxu0 %v369
    %468 = vmatprep.subr.mxu0 %v368
    %469 = vmatpush2.msra.mxu0 %v367
    %470 = vmatprep.subr.mxu0 %v366
    %471 = vmatpush2.msra.mxu0 %v365
    %472 = vmatprep.subr.mxu0 %v364
    %473 = vmatpush2.msra.mxu0 %v363
    %474 = vmatprep.subr.mxu0 %v362
    %475 = vmatpush2.msra.mxu0 %v361
    %476 = vmatprep.subr.mxu0 %v360
    %477 = vmatpush2.msra.mxu0 %v359
    %478 = vmatprep.subr.mxu0 %v358
    %479 = vmatpush2.msra.mxu0 %v357
    %480 = vmatprep.subr.mxu0 %v356
    %481 = vmatpush2.msra.mxu0 %v355
    %482 = vmatprep.subr.mxu0 %v354
    %483 = vmatpush2.msra.mxu0 %v353
    %484 = vmatprep.subr.mxu0 %v352
    %485 = vmatpush2.msra.mxu0 %v351
    %486 = vmatprep.subr.mxu0 %v350
    %487 = vmatpush2.msra.mxu0 %v349
    %488 = vmatprep.subr.mxu0 %v348
    %489 = vmatpush2.msra.mxu0 %v347
    %490 = vmatprep.subr.mxu0 %v346
    %491 = vmatpush2.msra.mxu0 %v345
    %492 = vmatprep.mubr.f32.mxu0 %v425
    %493 = vmatmul.mubr.f32.gmra.mxu0 %v418
    %v494 = vpop.f32.mrf.mxu0
    %v495 = vadd.f32 %v382, %v494
    %v496 = vpop.f32.mrf.mxu0
    %v497 = vadd.f32 %v386, %v496
    %498 = vdwg.mxu0
    %499 = vst [vmem:[#allocation5] sm:$0xff] %v495
    %500 = vst [vmem:[#allocation5 + $0x8] sm:$0xff] %v497
    // Predicated region
    $region26: #{tpu_custom_call.1} parent=1 // pred_check
      _
    $region27: #{tpu_custom_call.1} parent=1 // pred_check_branch
      %502 = sbr.rel (0) target = $region29
    $region28: #{tpu_custom_call.1} parent=1 // pred_region
      %s504 = ssub.s32 256, 256
      %505 = vsyncadd [#allocation4], %s504
      %s507 = sshll.u32 [#allocation5], 4
      %s508 = int_to_ptr.vmem [resolvable:$true] %s507
      %510 = dma.vmem_to_hbm [thread:$0]  %s508, 256, %s5, [#allocation4]
    $region29: #{tpu_custom_call.1} parent=1 // pred_fallthru
      _
    // Predicated region
    $region30: #{tpu_custom_call.1} parent=1 // pred_check
      _
    $region31: #{tpu_custom_call.1} parent=1 // pred_check_branch
      %512 = sbr.rel (0) target = $region33
    $region32: #{tpu_custom_call.1} parent=1 // pred_region
      %513 = dma.done [#allocation4], 256
    $region33: #{tpu_custom_call.1} parent=1 // pred_fallthru
      _
    %514 = vsyncpa [#allocation3], 1
    %515 = vsyncpa [#allocation4], 1

</llo_original>
